<compile_context>
chip_gen: v6e
topology: v6e:2x2x1
jax: 0.10.0
libtpu: 0.0.40
codegen_flags: <defaults>
</compile_context>

<pallas_src>
import functools

import jax
import jax.numpy as jnp
from jax.experimental import pallas as pl
from jax.experimental.pallas import tpu as pltpu


def _nll2d_kernel(logp_ref, tgt_ref, out_ref, acc_ref, *, hw_total, ragged):
    t = pl.program_id(1)

    @pl.when(t == 0)
    def _():
        acc_ref[...] = jnp.zeros_like(acc_ref)

    logp = logp_ref[0].astype(jnp.float32)            # (C, TILE_HW), upcast in-register
    tgt = tgt_ref[0]                                  # (1, TILE_HW) int32
    C, tile_hw = logp.shape

    chan = jax.lax.broadcasted_iota(jnp.int32, (C, tile_hw), 0)
    sel = chan == tgt                                 # (C, TILE_HW) one-hot mask
    contrib = jnp.where(sel, logp, 0.0)               # select, not multiply: -inf safe

    # Cheap sublane reduce over C -> lane-wise gathered log-prob per pixel.
    gathered = jnp.sum(contrib, axis=0, keepdims=True)          # (1, TILE_HW)

    if ragged:
        # Mask garbage lanes of the (possibly) partial last tile. Applied post-reduction so the
        # mask work is (1, tile) not (C, tile); jnp.where selects so garbage NaN/inf is dropped.
        lane = jax.lax.broadcasted_iota(jnp.int32, (1, tile_hw), 1)
        valid = (t * tile_hw + lane) < hw_total
        gathered = jnp.where(valid, gathered, 0.0)

    # Keep lane-wise partials resident across the hw axis; single cross-lane reduce at the end.
    acc_ref[...] += gathered

    @pl.when(t == pl.num_programs(1) - 1)
    def _():
        out_ref[0] = jnp.sum(acc_ref[...], axis=1, keepdims=True)   # (1, 1)


def _choose_tile_hw(hw, c, itemsize, *, max_block_bytes=2 << 20, max_tile=32768):
    """Pick a lane-dense tile along H*W: multiple of 128 (or the full extent)."""
    if hw <= 512:
        return hw                                      # full extent — always legal
    budget = max(max_block_bytes // max(c * itemsize, 1), 512)
    tile = min(hw, max_tile, budget)
    tile = max((tile // 128) * 128, 128)
    if tile >= hw:
        return hw
    return tile


def cross_entropy_loss_2d(inputs, targets):
    """inputs: (N, C, H, W) log-probs (any float dtype), targets: (N, H, W) ints -> scalar f32."""
    N, C, H, W = inputs.shape
    HW = H * W

    # Free (contiguous) reshapes only — no transpose, no pad, no dtype cast of the big slab.
    logp = inputs.reshape(N, C, HW)
    tgt = targets.reshape(N, 1, HW).astype(jnp.int32)

    itemsize = jnp.dtype(inputs.dtype).itemsize
    tile_hw = _choose_tile_hw(HW, C, itemsize)
    num_tiles = pl.cdiv(HW, tile_hw)
    ragged = (HW % tile_hw) != 0
    grid = (N, num_tiles)

    cost = pl.CostEstimate(
        flops=2 * N * C * HW,
        transcendentals=0,
        bytes_accessed=N * C * HW * itemsize + N * HW * 4 + N * 4,
    )

    partial = pl.pallas_call(
        functools.partial(_nll2d_kernel, hw_total=HW, ragged=ragged),
        out_shape=jax.ShapeDtypeStruct((N, 1, 1), jnp.float32),
        grid_spec=pltpu.PrefetchScalarGridSpec(
            num_scalar_prefetch=0,
            grid=grid,
            in_specs=[
                pl.BlockSpec((1, C, tile_hw), lambda n, t: (n, 0, t)),
                pl.BlockSpec((1, 1, tile_hw), lambda n, t: (n, 0, t)),
            ],
            out_specs=pl.BlockSpec((1, 1, 1), lambda n, t: (n, 0, 0)),
            scratch_shapes=[pltpu.VMEM((1, tile_hw), jnp.float32)],
        ),
        compiler_params=pltpu.CompilerParams(
            dimension_semantics=("parallel", "arbitrary"),
        ),
        cost_estimate=cost,
    )(logp, tgt)

    # size_average=True, weight=None: divide the summed gathered log-probs by N*H*W.
    return -(jnp.sum(partial) / jnp.float32(N * HW))

# TODO(synk): per-class `weight` (default None in the module) not implemented; it would need a
# second weighted-count accumulator for the size_average denominator.


if __name__ == "__main__":
    key = jax.random.PRNGKey(0)
    k1, k2 = jax.random.split(key)

    N, C, H, W = 2, 4, 16, 16
    logits = jax.random.normal(k1, (N, C, H, W), dtype=jnp.float32)
    # NLLLoss2d expects log-probabilities; the module does not add log_softmax,
    # so we provide log-probs as the example `inputs`.
    inputs = jax.nn.log_softmax(logits, axis=1)
    targets = jax.random.randint(k2, (N, H, W), 0, C, dtype=jnp.int32)

    loss = cross_entropy_loss_2d(inputs, targets)
    loss = jax.block_until_ready(loss)

    # Pure-JAX reference: -mean of gathered log-probs.
    gathered = jnp.take_along_axis(inputs, targets[:, None, :, :], axis=1)[:, 0]
    ref = -jnp.mean(gathered)

    assert jnp.allclose(loss, ref, atol=1e-5, rtol=1e-5), (loss, ref)
    print("KERNEL_OK")
</pallas_src>

<mosaic_0001>
module attributes {stable_mosaic.version = 11 : i64} {
  func.func @_nll2d_kernel(%arg0: i32, %arg1: i32, %arg2: memref<1x4x256xf32, #tpu.memory_space<vmem>>, %arg3: memref<1x1x256xi32, #tpu.memory_space<vmem>>, %arg4: memref<1x1x1xf32, #tpu.memory_space<vmem>>, %arg5: memref<1x256xf32, #tpu.memory_space<vmem>>) attributes {dimension_semantics = [#tpu.dimension_semantics<parallel>, #tpu.dimension_semantics<arbitrary>], iteration_bounds = array<i64: 2, 1>, scalar_prefetch = 0 : i64, scratch_operands = 1 : i64, tpu.core_type = #tpu.core_type<tc>, window_params = [{transform_indices = @transform_0, window_bounds = array<i64: 1, 4, 256>}, {transform_indices = @transform_1, window_bounds = array<i64: 1, 1, 256>}, {transform_indices = @transform_2, window_bounds = array<i64: 1, 1, 1>}]} {
    %c0_i32 = arith.constant 0 : i32
    %0 = arith.cmpi eq, %arg1, %c0_i32 : i32
    %1 = arith.extui %0 : i1 to i32
    %c0_i32_0 = arith.constant 0 : i32
    %2 = arith.cmpi ne, %1, %c0_i32_0 : i32
    scf.if %2 {
      %cst_13 = arith.constant 0.000000e+00 : f32
      %20 = vector.broadcast %cst_13 : f32 to vector<1x256xf32>
      %c0_14 = arith.constant 0 : index
      %c0_15 = arith.constant 0 : index
      %21 = vector.load %arg5[%c0_14, %c0_15] : memref<1x256xf32, #tpu.memory_space<vmem>>, vector<1x256xf32>
      tpu.vector_store %arg5[%c0_14, %c0_15], %20 {strides = array<i32>} : memref<1x256xf32, #tpu.memory_space<vmem>>, vector<1x256xf32>,
    } else {
    }
    %c0 = arith.constant 0 : index
    %c0_1 = arith.constant 0 : index
    %c0_2 = arith.constant 0 : index
    %3 = vector.load %arg2[%c0, %c0_1, %c0_2] : memref<1x4x256xf32, #tpu.memory_space<vmem>>, vector<1x4x256xf32>
    %4 = vector.shape_cast %3 : vector<1x4x256xf32> to vector<4x256xf32>
    %c0_3 = arith.constant 0 : index
    %c0_4 = arith.constant 0 : index
    %c0_5 = arith.constant 0 : index
    %5 = vector.load %arg3[%c0_3, %c0_4, %c0_5] : memref<1x1x256xi32, #tpu.memory_space<vmem>>, vector<1x1x256xi32>
    %6 = vector.shape_cast %5 : vector<1x1x256xi32> to vector<1x256xi32>
    %7 = tpu.iota {dimensions = array<i32: 0>} : vector<4x256xi32>
    %8 = vector.broadcast %6 : vector<1x256xi32> to vector<4x256xi32>
    %9 = arith.cmpi eq, %7, %8 : vector<4x256xi32>
    %cst = arith.constant 0.000000e+00 : f32
    %10 = vector.broadcast %cst : f32 to vector<4x256xf32>
    %11 = arith.select %9, %4, %10 : vector<4x256xi1>, vector<4x256xf32>
    %cst_6 = arith.constant dense<0.000000e+00> : vector<256xf32>
    %12 = vector.multi_reduction <add>, %11, %cst_6 [0] : vector<4x256xf32> to vector<256xf32>
    %13 = vector.shape_cast %12 : vector<256xf32> to vector<1x256xf32>
    %c0_7 = arith.constant 0 : index
    %c0_8 = arith.constant 0 : index
    %14 = vector.load %arg5[%c0_7, %c0_8] : memref<1x256xf32, #tpu.memory_space<vmem>>, vector<1x256xf32>
    %15 = arith.addf %14, %13 : vector<1x256xf32>
    %c0_9 = arith.constant 0 : index
    %c0_10 = arith.constant 0 : index
    %16 = vector.load %arg5[%c0_9, %c0_10] : memref<1x256xf32, #tpu.memory_space<vmem>>, vector<1x256xf32>
    tpu.vector_store %arg5[%c0_9, %c0_10], %15 {strides = array<i32>} : memref<1x256xf32, #tpu.memory_space<vmem>>, vector<1x256xf32>,
    %c0_i32_11 = arith.constant 0 : i32
    %17 = arith.cmpi eq, %arg1, %c0_i32_11 : i32
    %18 = arith.extui %17 : i1 to i32
    %c0_i32_12 = arith.constant 0 : i32
    %19 = arith.cmpi ne, %18, %c0_i32_12 : i32
    scf.if %19 {
      %c0_13 = arith.constant 0 : index
      %c0_14 = arith.constant 0 : index
      %20 = vector.load %arg5[%c0_13, %c0_14] : memref<1x256xf32, #tpu.memory_space<vmem>>, vector<1x256xf32>
      %cst_15 = arith.constant dense<0.000000e+00> : vector<1xf32>
      %21 = vector.multi_reduction <add>, %20, %cst_15 [1] : vector<1x256xf32> to vector<1xf32>
      %22 = vector.shape_cast %21 : vector<1xf32> to vector<1x1xf32>
      %c0_16 = arith.constant 0 : index
      %c0_17 = arith.constant 0 : index
      %c0_18 = arith.constant 0 : index
      %23 = vector.load %arg4[%c0_16, %c0_17, %c0_18] : memref<1x1x1xf32, #tpu.memory_space<vmem>>, vector<1x1x1xf32>
      %24 = vector.shape_cast %23 : vector<1x1x1xf32> to vector<1x1xf32>
      %25 = vector.shape_cast %22 : vector<1x1xf32> to vector<1x1x1xf32>
      tpu.vector_store %arg4[%c0_16, %c0_17, %c0_18], %25 {strides = array<i32>} : memref<1x1x1xf32, #tpu.memory_space<vmem>>, vector<1x1x1xf32>,
    } else {
    }
    return
  }
  func.func @transform_0(%arg0: i32, %arg1: i32) -> (i32, i32, i32) {
    %c0_i32 = arith.constant 0 : i32
    %c0_i32_0 = arith.constant 0 : i32
    return %arg0, %c0_i32, %arg1 : i32, i32, i32
  }
  func.func @transform_1(%arg0: i32, %arg1: i32) -> (i32, i32, i32) {
    %c0_i32 = arith.constant 0 : i32
    %c0_i32_0 = arith.constant 0 : i32
    return %arg0, %c0_i32, %arg1 : i32, i32, i32
  }
  func.func @transform_2(%arg0: i32, %arg1: i32) -> (i32, i32, i32) {
    %c0_i32 = arith.constant 0 : i32
    %c0_i32_0 = arith.constant 0 : i32
    %c0_i32_1 = arith.constant 0 : i32
    return %arg0, %c0_i32, %c0_i32_0 : i32, i32, i32
  }
}

</mosaic_0001>

<llo_original>
// kernel: tpu_custom_call.1
$region0: #{tpu_custom_call.1}
  #allocation0 [shape = 'u32[]', space=smem, size = 0x4, offset = 0x4, fixed_abs, tag = 'smem constant byte address 0x4 - core index']
  #allocation1 [shape = 'u32[144,128]{1,0:T(1,128)}', space=vmem, size = 0x12000, scoped, tag = 'internal scratch']
  #allocation2 [shape = 'f32[1,256]{1,0:T(1,128)}', space=vmem, size = 0x400, scoped, tag = 'scratch operand']
  %s0 = inlined_call_operand.hbm [shape: f32[2,4,256], index: 0, kind: input, shape index: {}]
  %s1 = inlined_call_operand.hbm [shape: s32[2,1,256], index: 1, kind: input, shape index: {}]
  %s2 = inlined_call_operand.vmem [shape: f32[2,1,1], index: 2, kind: output, shape index: {}]
  %s3 = sld [smem:[#allocation0]]
  $region57: #{tpu_custom_call.1} parent=0
    _
  %s5 = ssub.s32 1, %s3
  %s6 = scalar_select 0, %s5, %s3
  $region1: #{tpu_custom_call.1} parent=0
    #allocation3 [shape = 'u8[8192]{0}', space=vmem, size = 0x2000, scoped, tag = 'input window, operand 0']
    #allocation4 [shape = 's32[2]{0}', space=sflag, size = 0x8, scoped, tag = 'scoped memory for tpu_custom_call.1']
    #allocation5 [shape = 'u8[2048]{0}', space=vmem, size = 0x800, scoped, tag = 'input window, operand 1']
    #allocation6 [shape = 's32[2]{0}', space=sflag, size = 0x8, scoped, tag = 'scoped memory for tpu_custom_call.1']
    %7 = vsyncpa [#allocation4], 0
    %s8 = scalar_lea.sflag [#allocation4], 1
    %9 = vsyncpa %s8, 0
    %10 = vsyncpa [#allocation6], 0
    %s11 = scalar_lea.sflag [#allocation6], 1
    %12 = vsyncpa %s11, 0
    loop: start=0, step=1, limit=4
    $region2: #{tpu_custom_call.1} parent=1 // loop_pre_header
      _
    $region3: #{tpu_custom_call.1} parent=1 // loop_header
      %s14 = sphi 0, %s18
      %p15 = scmp.ge.s32.totalorder %s14, 4
      %s21 = sphi 0, %s33
      %s22 = sphi 0, %s29
      %s23 = sphi 0, %s21
      %s24 = sphi 0, %s22
      %s25 = sphi 0, %s23
      %s26 = sphi 0, %s24
      %s38 = sphi 0, %s40
      %s41 = sphi 0, %s38
      %s42 = sphi 0, %s41
      %s58 = sphi 0, %s42
      %s66 = sphi 0, %s68
      %s69 = sphi 0, %s66
      %s70 = sphi 0, %s69
      %s86 = sphi 0, %s70
      %s92 = sphi 0, %s94
      %s95 = sphi 0, %s92
      %s96 = sphi 0, %s95
      %s112 = sphi 0, %s96
    $region4: #{tpu_custom_call.1} parent=1 // loop_header_branch
      %17 = sbr.rel (%p15) target = $region8
    $region5: #{tpu_custom_call.1} parent=1 // loop_body
      %s19 = ssub.s32 %s14, 1
      %s20 = ssub.s32 %s14, 2
      %s27 = sadd.s32 1, %s22
      %p28 = scmp.ge.s32.totalorder %s27, 1
      %s29 = scalar_select %p28, 0, %s27
      %s30 = sadd.s32 1, %s21
      %s31 = scalar_select %p28, %s30, %s21
      %p32 = scmp.ge.s32.totalorder %s31, 2
      %s33 = scalar_select %p32, 0, %s31
      %s34 = ssub.s32 %s21, %s33
      %s35 = ssub.s32 %s22, %s29
      %s36 = sor.u32 %s34, %s35
      %p37 = scmp.eq.s32.totalorder %s36, 0
      %s39 = sadd.s32 %s38, 1
      %s40 = scalar_select %p37, %s38, %s39
      %p43 = pneg %p37
      %p44 = scmp.eq.s32.totalorder %s14, 1
      %p45 = por %p43, %p44
      %p46 = scmp.ne.s32.totalorder %s38, %s41
      %p47 = scmp.eq.s32.totalorder %s14, 0
      %p48 = por %p46, %p47
      %p49 = scmp.ne.s32.totalorder %s38, %s41
      %p50 = scmp.eq.s32.totalorder %s19, 1
      %p51 = por %p49, %p50
      %p52 = scmp.ne.s32.totalorder %s41, %s42
      %p53 = scmp.eq.s32.totalorder %s19, 0
      %p54 = por %p52, %p53
      %p55 = scmp.ne.s32.totalorder %s41, %s42
      %p56 = scmp.eq.s32.totalorder %s20, 1
      %p57 = por %p55, %p56
      %p59 = scmp.ne.s32.totalorder %s42, %s58
      %p60 = scmp.eq.s32.totalorder %s20, 0
      %p61 = por %p59, %p60
      %s62 = ssub.s32 %s21, %s33
      %s63 = ssub.s32 %s22, %s29
      %s64 = sor.u32 %s62, %s63
      %p65 = scmp.eq.s32.totalorder %s64, 0
      %s67 = sadd.s32 %s66, 1
      %s68 = scalar_select %p65, %s66, %s67
      %p71 = pneg %p65
      %p72 = scmp.eq.s32.totalorder %s14, 1
      %p73 = por %p71, %p72
      %p74 = scmp.ne.s32.totalorder %s66, %s69
      %p75 = scmp.eq.s32.totalorder %s14, 0
      %p76 = por %p74, %p75
      %p77 = scmp.ne.s32.totalorder %s66, %s69
      %p78 = scmp.eq.s32.totalorder %s19, 1
      %p79 = por %p77, %p78
      %p80 = scmp.ne.s32.totalorder %s69, %s70
      %p81 = scmp.eq.s32.totalorder %s19, 0
      %p82 = por %p80, %p81
      %p83 = scmp.ne.s32.totalorder %s69, %s70
      %p84 = scmp.eq.s32.totalorder %s20, 1
      %p85 = por %p83, %p84
      %p87 = scmp.ne.s32.totalorder %s70, %s86
      %p88 = scmp.eq.s32.totalorder %s20, 0
      %p89 = por %p87, %p88
      %s90 = ssub.s32 %s21, %s33
      %p91 = scmp.eq.s32.totalorder %s90, 0
      %s93 = sadd.s32 %s92, 1
      %s94 = scalar_select %p91, %s92, %s93
      %p97 = pneg %p91
      %p98 = scmp.eq.s32.totalorder %s14, 1
      %p99 = por %p97, %p98
      %p100 = scmp.ne.s32.totalorder %s92, %s95
      %p101 = scmp.eq.s32.totalorder %s14, 0
      %p102 = por %p100, %p101
      %p103 = scmp.ne.s32.totalorder %s92, %s95
      %p104 = scmp.eq.s32.totalorder %s19, 1
      %p105 = por %p103, %p104
      %p106 = scmp.ne.s32.totalorder %s95, %s96
      %p107 = scmp.eq.s32.totalorder %s19, 0
      %p108 = por %p106, %p107
      %p109 = scmp.ne.s32.totalorder %s95, %s96
      %p110 = scmp.eq.s32.totalorder %s20, 1
      %p111 = por %p109, %p110
      %p113 = scmp.ne.s32.totalorder %s96, %s112
      %p114 = scmp.eq.s32.totalorder %s20, 0
      %p115 = por %p113, %p114
      %p116 = scmp.le.s32.totalorder 1, %s14
      %p117 = scmp.lt.s32.totalorder %s14, 3
      %p118 = pnand %p116, %p117
      %p119 = pneg %p118
      // Predicated region
      $region9: #{tpu_custom_call.1} parent=5 // pred_check
        _
      $region10: #{tpu_custom_call.1} parent=5 // pred_check_branch
        %121 = sbr.rel (%p118) target = $region12
      $region11: #{tpu_custom_call.1} parent=5 // pred_region
        %s122 = ssub.s32 %s14, 1
      $region12: #{tpu_custom_call.1} parent=5 // pred_fallthru
        _
      %p123 = scmp.lt.s32.totalorder %s14, 2
      // Predicated region
      $region13: #{tpu_custom_call.1} parent=5 // pred_check
        %p124 = pneg %p123
      $region14: #{tpu_custom_call.1} parent=5 // pred_check_branch
        %126 = sbr.rel (%p124) target = $region16
      $region15: #{tpu_custom_call.1} parent=5 // pred_region
        // Predicated region
        $region17: #{tpu_custom_call.1} parent=15 // pred_check
          %p127 = pneg %p48
        $region18: #{tpu_custom_call.1} parent=15 // pred_check_branch
          %129 = sbr.rel (%p127) target = $region20
        $region19: #{tpu_custom_call.1} parent=15 // pred_region
          %s130 = sand.u32 %s38, 1
          %s131 = scalar_lea.sflag [#allocation4], %s130
          %s132 = sand.u32 %s38, 1
          %s133 = smul.addr %s132, 8
          %s134 = scalar_lea.vmem [#allocation3], %s133
          %s135 = smul.u32 2, %s22
          %s137 = ssub.s32 128, 128
          %138 = vsyncadd %s131, %s137
          %s139 = smul.addr %s21, 2
          %s140 = sadd.s32 %s135, %s139
          %s141 = smul.addr %s140, 64
          %s142 = scalar_lea.hbm %s0, %s141
          %s144 = sshll.u32 %s134, 4
          %s145 = int_to_ptr.vmem [resolvable:$true] %s144
          %147 = dma.hbm_to_vmem [thread:$0]  %s142, 128, %s145, %s131
        $region20: #{tpu_custom_call.1} parent=15 // pred_fallthru
          _
        // Predicated region
        $region21: #{tpu_custom_call.1} parent=15 // pred_check
          %p148 = pneg %p76
        $region22: #{tpu_custom_call.1} parent=15 // pred_check_branch
          %150 = sbr.rel (%p148) target = $region24
        $region23: #{tpu_custom_call.1} parent=15 // pred_region
          %s151 = sand.u32 %s66, 1
          %s152 = scalar_lea.sflag [#allocation6], %s151
          %s153 = sand.u32 %s66, 1
          %s154 = smul.addr %s153, 2
          %s155 = scalar_lea.vmem [#allocation5], %s154
          %s156 = smul.u32 2, %s22
          %s158 = ssub.s32 32, 32
          %159 = vsyncadd %s152, %s158
          %s160 = smul.addr %s21, 2
          %s161 = sadd.s32 %s156, %s160
          %s162 = smul.addr %s161, 16
          %s163 = scalar_lea.hbm %s1, %s162
          %s165 = sshll.u32 %s155, 4
          %s166 = int_to_ptr.vmem [resolvable:$true] %s165
          %168 = dma.hbm_to_vmem [thread:$0]  %s163, 32, %s166, %s152
        $region24: #{tpu_custom_call.1} parent=15 // pred_fallthru
          _
      $region16: #{tpu_custom_call.1} parent=5 // pred_fallthru
        _
      %p169 = scmp.le.s32.totalorder 1, %s14
      %p170 = scmp.lt.s32.totalorder %s14, 3
      %p171 = pnand %p169, %p170
      %p172 = pneg %p171
      // Predicated region
      $region25: #{tpu_custom_call.1} parent=5 // pred_check
        _
      $region26: #{tpu_custom_call.1} parent=5 // pred_check_branch
        %174 = sbr.rel (%p171) target = $region28
      $region27: #{tpu_custom_call.1} parent=5 // pred_region
        %s175 = ssub.s32 %s14, 1
        %s176 = sand.u32 %s41, 1
        %s177 = scalar_lea.sflag [#allocation4], %s176
        %s178 = sand.u32 %s41, 1
        %s179 = smul.addr %s178, 8
        %s180 = scalar_lea.vmem [#allocation3], %s179
        // Predicated region
        $region29: #{tpu_custom_call.1} parent=27 // pred_check
          %p181 = pneg %p54
        $region30: #{tpu_custom_call.1} parent=27 // pred_check_branch
          %183 = sbr.rel (%p181) target = $region32
        $region31: #{tpu_custom_call.1} parent=27 // pred_region
          %184 = dma.done %s177, 128
        $region32: #{tpu_custom_call.1} parent=27 // pred_fallthru
          _
        %s185 = sand.u32 %s69, 1
        %s186 = scalar_lea.sflag [#allocation6], %s185
        %s187 = sand.u32 %s69, 1
        %s188 = smul.addr %s187, 2
        %s189 = scalar_lea.vmem [#allocation5], %s188
        // Predicated region
        $region33: #{tpu_custom_call.1} parent=27 // pred_check
          %p190 = pneg %p82
        $region34: #{tpu_custom_call.1} parent=27 // pred_check_branch
          %192 = sbr.rel (%p190) target = $region36
        $region35: #{tpu_custom_call.1} parent=27 // pred_region
          %193 = dma.done %s186, 32
        $region36: #{tpu_custom_call.1} parent=27 // pred_fallthru
          _
        %s194 = sand.u32 %s41, 1
        %s195 = scalar_lea.sflag [#allocation4], %s194
        %s196 = sand.u32 %s41, 1
        %s197 = smul.addr %s196, 8
        %s198 = scalar_lea.vmem [#allocation3], %s197
        %p199 = pneg %p54
        %p200 = pneg %p51
        %s201 = sand.u32 %s69, 1
        %s202 = scalar_lea.sflag [#allocation6], %s201
        %s203 = sand.u32 %s69, 1
        %s204 = smul.addr %s203, 2
        %s205 = scalar_lea.vmem [#allocation5], %s204
        %p206 = pneg %p82
        %p207 = pneg %p79
        %p208 = pneg %p108
        %p209 = pneg %p105
        %p210 = scmp.lt.s32.totalorder %s23, 1
        %s211 = scalar_select %p210, %s23, 1
        %s212 = scalar_lea.vmem %s2, %s211
        %s213 = smul.u32 2, %s24
        %s214 = smul.u32 2, %s24
        %p215 = scmp.lt.s32.totalorder %s23, 1
        %s216 = scalar_select %p215, %s23, 1
        %s217 = scalar_lea.vmem %s2, %s216
        %p218 = scmp.eq.s32.totalorder %s24, 0
        // Predicated region
        $region37: #{tpu_custom_call.1} parent=27 // pred_check
          %p219 = pneg %p218
        $region38: #{tpu_custom_call.1} parent=27 // pred_check_branch
          %221 = sbr.rel (%p219) target = $region40
        $region39: #{tpu_custom_call.1} parent=27 // pred_region
          %v222 = vlaneseq
          %vm223 = vcmp.ge.s32.totalorder %v222, 0
          %vm224 = vcmp.lt.s32.totalorder %v222, 256
          %vm225 = vmand %vm223, %vm224
          %226 = vst.msk [vmem:[#allocation2] sm:$0x3] %vm225, 0.0
        $region40: #{tpu_custom_call.1} parent=27 // pred_fallthru
          _
        %v227 = vld [vmem:[%s180] sm:$0xff]
        %v228 = vld [vmem:[%s189] sm:$0x3]
        %v229 = vlaneseq
        %v230 = vshrl.u32 %v229, 7
        %v231 = vlaneseq
        %v232 = vshrl.u32 %v231, 7
        %v233 = vsub.s32 0, %v232
        %v234 = vrot.slane %v228, %v233
        %v235 = vlaneseq
        %v236 = vshrl.u32 %v235, 7
        %v237 = vsub.s32 1, %v236
        %v238 = vrot.slane %v228, %v237
        %vm239 = vcmp.eq.s32.totalorder %v230, %v234
        %vm240 = vcmp.eq.s32.totalorder %v230, %v238
        %v242 = vcombine.high %v227, %v227
        %v244 = vsel %vm239, %v227, 0.0
        %v245 = vsel %vm240, %v242, 0.0
        %vm246 = vcmask 1043456
        %v247 = vsel %vm246, %v244, 0.0
        %v248 = vrot.slane %v247, 4
        %v249 = vadd.f32 %v247, %v248
        %v250 = vrot.slane %v249, 2
        %v251 = vadd.f32 %v249, %v250
        %v252 = vrot.slane %v251, 1
        %v253 = vadd.f32 %v251, %v252
        %v254 = vsel %vm246, %v245, 0.0
        %v255 = vrot.slane %v254, 4
        %v256 = vadd.f32 %v254, %v255
        %v257 = vrot.slane %v256, 2
        %v258 = vadd.f32 %v256, %v257
        %v259 = vrot.slane %v258, 1
        %v260 = vadd.f32 %v258, %v259
        %v261 = vld [vmem:[#allocation2] sm:$0x3]
        %v264 = vcombine.low %v253, %v260
        %v266 = vunpack.c.l.s4 1966171168
        %v267 = vunpack.c.0.s8 %v266
        %v268 = vlaneseq
        %v269 = vshrl.u32 %v268, 7
        %v270 = vsub.s32 %v267, %v269
        %v271 = vrot.slane %v264, %v270
        %v273 = vunpack.c.l.s4 1966171168
        %v274 = vunpack.c.0.s8 %v273
        %v275 = vlaneseq
        %v276 = vshrl.u32 %v275, 7
        %v277 = vsub.s32 %v274, %v276
        %v278 = vrot.slane %v271, %v277
        %v280 = vadd.f32 %v261, %v278
        %v281 = vlaneseq
        %vm282 = vcmp.ge.s32.totalorder %v281, 0
        %vm283 = vcmp.lt.s32.totalorder %v281, 256
        %vm284 = vmand %vm282, %vm283
        %285 = vst.msk [vmem:[#allocation2] sm:$0x3] %vm284, %v280
        // Predicated region
        $region41: #{tpu_custom_call.1} parent=27 // pred_check
          %p286 = pneg %p218
        $region42: #{tpu_custom_call.1} parent=27 // pred_check_branch
          %288 = sbr.rel (%p286) target = $region44
        $region43: #{tpu_custom_call.1} parent=27 // pred_region
          %v289 = vld [vmem:[#allocation2] sm:$0x3]
          %v291 = vlaneseq
          %v292 = vshrl.u32 %v291, 7
          %v293 = vsub.s32 0, %v292
          %v294 = vrot.slane %v289, %v293
          %v295 = vlaneseq
          %v296 = vshrl.u32 %v295, 7
          %v297 = vsub.s32 1, %v296
          %v298 = vrot.slane %v289, %v297
          %vm301 = vcmask 1040384
          %v302 = vsel %vm301, %v294, 0.0
          %v303 = vsel %vm301, %v298, 0.0
          %v304 = vadd.f32 %v302, %v303
          %305 = vadd.xlane.f32.xlu0 %v304
          %v306 = vpop.xlane.xlu0 %305
          %vm307 = vcmask 0
          %308 = vst.msk [vmem:[%s217] sm:$0x1] %vm307, %v306
        $region44: #{tpu_custom_call.1} parent=27 // pred_fallthru
          _
        %p309 = scmp.lt.s32.totalorder %s23, 1
        %s310 = scalar_select %p309, %s23, 1
        %s311 = scalar_lea.vmem %s2, %s310
        // Predicated region
        $region45: #{tpu_custom_call.1} parent=27 // pred_check
          %p312 = pneg %p105
        $region46: #{tpu_custom_call.1} parent=27 // pred_check_branch
          %314 = sbr.rel (%p312) target = $region48
        $region47: #{tpu_custom_call.1} parent=27 // pred_region
          _
        $region48: #{tpu_custom_call.1} parent=27 // pred_fallthru
          _
      $region28: #{tpu_custom_call.1} parent=5 // pred_fallthru
        _
      %p315 = scmp.le.s32.totalorder 2, %s14
      // Predicated region
      $region49: #{tpu_custom_call.1} parent=5 // pred_check
        %p316 = pneg %p315
      $region50: #{tpu_custom_call.1} parent=5 // pred_check_branch
        %318 = sbr.rel (%p316) target = $region52
      $region51: #{tpu_custom_call.1} parent=5 // pred_region
        %s319 = ssub.s32 %s14, 2
        // Predicated region
        $region53: #{tpu_custom_call.1} parent=51 // pred_check
          %p320 = pneg %p111
        $region54: #{tpu_custom_call.1} parent=51 // pred_check_branch
          %322 = sbr.rel (%p320) target = $region56
        $region55: #{tpu_custom_call.1} parent=51 // pred_region
          %p323 = scmp.lt.s32.totalorder %s25, 1
          %s324 = scalar_select %p323, %s25, 1
          %s325 = scalar_lea.vmem %s2, %s324
        $region56: #{tpu_custom_call.1} parent=51 // pred_fallthru
          _
      $region52: #{tpu_custom_call.1} parent=5 // pred_fallthru
        _
    $region6: #{tpu_custom_call.1} parent=1 // loop_footer
      %s18 = sadd.s32 1, %s14
    $region7: #{tpu_custom_call.1} parent=1 // loop_footer_branch
      %13 = sbr.rel target = $region3
    $region8: #{tpu_custom_call.1} parent=1 // loop_exit
      _
    %326 = vsyncpa [#allocation4], 1
    %s327 = scalar_lea.sflag [#allocation4], 1
    %328 = vsyncpa %s327, 1
    %329 = vsyncpa [#allocation6], 1
    %s330 = scalar_lea.sflag [#allocation6], 1
    %331 = vsyncpa %s330, 1

</llo_original>
